<compile_context>
chip_gen: v5e
topology: v5e:2x2
jax: 0.10.0
libtpu: 0.0.40
codegen_flags: <defaults>
</compile_context>

<pallas_src>
import jax
import jax.numpy as jnp
from jax.experimental import pallas as pl
from jax.experimental.pallas import tpu as pltpu


def _double_gpu_net_kernel(xT_ref, w1_ref, w2_ref, w3_ref, out_ref):
    xT = xT_ref[...]                                   # [2, TB]
    w1 = w1_ref[...]                                   # [10, 2] (PyTorch [out, in])

    # fc1 (K=2): contraction far too small for the MXU -> two packed VPU
    # broadcast-FMAs over the [10, TB] layout, then ReLU.
    h1 = jnp.maximum(w1[:, 0:1] * xT[0:1, :] + w1[:, 1:2] * xT[1:2, :], 0.0)

    # fc2 (10 -> 50): MXU matmul, lane-dense [50, TB]; ReLU on the VPU.
    h2 = jnp.maximum(
        jnp.dot(w2_ref[...], h1, preferred_element_type=jnp.float32), 0.0)

    # fc3 (50 -> 4): MXU matmul; [4, TB] keeps the batch on dense lanes.
    logits = jnp.dot(w3_ref[...], h2, preferred_element_type=jnp.float32)

    # Softmax over the 4-wide feature axis (= sublanes): cheap 4-row reduce,
    # exp on the EUP, exact reciprocal so every row sums to 1 in f32.
    m = jnp.max(logits, axis=0, keepdims=True)         # [1, TB]
    e = jnp.exp(logits - m)                            # [4, TB]
    denom = jnp.sum(e, axis=0, keepdims=True)          # [1, TB]
    out_ref[...] = (e * pl.reciprocal(denom)).astype(out_ref.dtype)


def double_gpu_net_forward(x, w1, w2, w3, *, tb=8192):
    """x: [B, 2] f32; weights in PyTorch [out, in] layout. Returns [B, 4] f32."""
    B = x.shape[0]

    # Batch tiles live on the lane axis -> tile must be a multiple of 128.
    # Sizing rules:
    #   * default tb=8192 (~3.5 MiB VMEM incl. temporaries and double buffers,
    #     far under the 32 MiB cap below) amortizes the fixed per-step cost,
    #   * keep >= 2 grid steps whenever B spans more than one 128-lane group
    #     so the "parallel" grid axis can use both TensorCores on v7x,
    #   * never below a single 128-lane group.
    lane_groups = pl.cdiv(B, 128)
    tb = max(128, (tb // 128) * 128)
    if lane_groups > 1:
        tb = min(tb, 128 * pl.cdiv(lane_groups, 2))
    else:
        tb = 128
    n_blocks = pl.cdiv(B, tb)
    Bp = n_blocks * tb

    # No jnp.pad: the input's ragged final block is read partially by Pallas
    # (stale tail lanes only feed a per-lane softmax and are sliced off below);
    # the output is allocated at the padded width so every kernel store is a
    # full, unmasked lane-dense vst.
    xT = x.T                                            # [2, B]

    outT = pl.pallas_call(
        _double_gpu_net_kernel,
        out_shape=jax.ShapeDtypeStruct((4, Bp), jnp.float32),
        grid_spec=pltpu.PrefetchScalarGridSpec(
            num_scalar_prefetch=0,
            grid=(n_blocks,),
            in_specs=[
                pl.BlockSpec((2, tb), lambda i: (0, i)),       # batch-tiled x
                pl.BlockSpec(w1.shape, lambda i: (0, 0)),      # weights stay
                pl.BlockSpec(w2.shape, lambda i: (0, 0)),      # VMEM-resident
                pl.BlockSpec(w3.shape, lambda i: (0, 0)),      # (constant idx)
            ],
            out_specs=pl.BlockSpec((4, tb), lambda i: (0, i)),  # lane-dense out
        ),
        compiler_params=pltpu.CompilerParams(
            # Independent batch tiles: shard across both TCs on v7x; no-op on
            # single-core v5e/v6e.
            dimension_semantics=("parallel",),
            # Explicit scoped-VMEM budget: well above the ~3.5 MiB footprint
            # at tb=8192, above v5e's 16 MiB default scoped limit, and safely
            # below v7x's 64 MiB physical VMEM.
            vmem_limit_bytes=32 * 1024 * 1024,
        ),
    )(xT, w1, w2, w3)                                   # [4, Bp]

    return outT[:, :B].T                                # [B, 4]


def init_params(key):
    """Deterministic init mimicking nn.Linear kaiming-uniform bounds.

    Weights are kept in the native PyTorch [out, in] layout (no transpose
    needed with the batch-on-lanes kernel layout).
    """
    k1, k2, k3 = jax.random.split(key, 3)

    def linear_w(k, out_f, in_f):
        bound = 1.0 / jnp.sqrt(in_f)
        return jax.random.uniform(k, (out_f, in_f), jnp.float32, -bound, bound)

    w1 = linear_w(k1, 10, 2)     # fc1.weight [10, 2]
    w2 = linear_w(k2, 50, 10)    # fc2.weight [50, 10]
    w3 = linear_w(k3, 4, 50)     # fc3.weight [4, 50]
    # no_grad_param (torch.tensor([2, 2]).long()) never enters the forward.
    no_grad_param = jnp.array([2, 2], dtype=jnp.int32)
    return (w1, w2, w3), no_grad_param


def reference_forward(x, w1, w2, w3):
    h1 = jnp.maximum(x @ w1.T, 0.0)
    h2 = jnp.maximum(h1 @ w2.T, 0.0)
    logits = h2 @ w3.T
    return jax.nn.softmax(logits, axis=1)


if __name__ == "__main__":
    key = jax.random.PRNGKey(0)
    kx, kx2, kp = jax.random.split(key, 3)

    (w1, w2, w3), _ = init_params(kp)

    # Small batch consistent with the module (Linear(2, ...)): B=8.
    x_small = jax.random.normal(kx, (8, 2), dtype=jnp.float32)
    out_small = jax.block_until_ready(double_gpu_net_forward(x_small, w1, w2, w3))
    ref_small = reference_forward(x_small, w1, w2, w3)
    assert out_small.shape == (8, 4)
    # Tolerance covers MXU-vs-XLA matmul pass differences; normalization itself
    # is exact, so the row-sum check is tight.
    assert jnp.allclose(out_small, ref_small, atol=2e-3, rtol=2e-3), "mismatch"
    assert jnp.allclose(jnp.sum(out_small, axis=1), jnp.ones((8,)), atol=1e-5)

    # Ragged, multi-block batch: exercises the >=2-block grid (v7x 2-TC path)
    # and Pallas's partial final-block handling (no explicit padding anywhere).
    x_odd = jax.random.normal(kx2, (300, 2), dtype=jnp.float32)
    out_odd = jax.block_until_ready(double_gpu_net_forward(x_odd, w1, w2, w3))
    ref_odd = reference_forward(x_odd, w1, w2, w3)
    assert out_odd.shape == (300, 4)
    assert jnp.allclose(out_odd, ref_odd, atol=2e-3, rtol=2e-3), "mismatch"
    assert jnp.allclose(jnp.sum(out_odd, axis=1), jnp.ones((300,)), atol=1e-5)

    print("KERNEL_OK")
</pallas_src>

<mosaic_0001>
module attributes {stable_mosaic.version = 11 : i64} {
  func.func @_double_gpu_net_kernel(%arg0: i32, %arg1: memref<2x128xf32, #tpu.memory_space<vmem>>, %arg2: memref<10x2xf32, #tpu.memory_space<vmem>>, %arg3: memref<50x10xf32, #tpu.memory_space<vmem>>, %arg4: memref<4x50xf32, #tpu.memory_space<vmem>>, %arg5: memref<4x128xf32, #tpu.memory_space<vmem>>) attributes {dimension_semantics = [#tpu.dimension_semantics<parallel>], iteration_bounds = array<i64: 1>, scalar_prefetch = 0 : i64, scratch_operands = 0 : i64, tpu.core_type = #tpu.core_type<tc>, window_params = [{transform_indices = @transform_0, window_bounds = array<i64: 2, 128>}, {pipeline_mode = #tpu.pipeline_mode<synchronous>, transform_indices = @transform_1, window_bounds = array<i64: 10, 2>}, {pipeline_mode = #tpu.pipeline_mode<synchronous>, transform_indices = @transform_2, window_bounds = array<i64: 50, 10>}, {pipeline_mode = #tpu.pipeline_mode<synchronous>, transform_indices = @transform_3, window_bounds = array<i64: 4, 50>}, {transform_indices = @transform_4, window_bounds = array<i64: 4, 128>}]} {
    %c0 = arith.constant 0 : index
    %c0_0 = arith.constant 0 : index
    %0 = vector.load %arg1[%c0, %c0_0] : memref<2x128xf32, #tpu.memory_space<vmem>>, vector<2x128xf32>
    %c0_1 = arith.constant 0 : index
    %c0_2 = arith.constant 0 : index
    %1 = vector.load %arg2[%c0_1, %c0_2] : memref<10x2xf32, #tpu.memory_space<vmem>>, vector<10x2xf32>
    %2 = vector.extract_strided_slice %1 {offsets = [0, 0], sizes = [10, 1], strides = [1, 1]} : vector<10x2xf32> to vector<10x1xf32>
    %3 = vector.extract_strided_slice %0 {offsets = [0, 0], sizes = [1, 128], strides = [1, 1]} : vector<2x128xf32> to vector<1x128xf32>
    %4 = vector.broadcast %2 : vector<10x1xf32> to vector<10x128xf32>
    %5 = vector.broadcast %3 : vector<1x128xf32> to vector<10x128xf32>
    %6 = arith.mulf %4, %5 : vector<10x128xf32>
    %7 = vector.extract_strided_slice %1 {offsets = [0, 1], sizes = [10, 1], strides = [1, 1]} : vector<10x2xf32> to vector<10x1xf32>
    %8 = vector.extract_strided_slice %0 {offsets = [1, 0], sizes = [1, 128], strides = [1, 1]} : vector<2x128xf32> to vector<1x128xf32>
    %9 = vector.broadcast %7 : vector<10x1xf32> to vector<10x128xf32>
    %10 = vector.broadcast %8 : vector<1x128xf32> to vector<10x128xf32>
    %11 = arith.mulf %9, %10 : vector<10x128xf32>
    %12 = arith.addf %6, %11 : vector<10x128xf32>
    %cst = arith.constant 0.000000e+00 : f32
    %13 = vector.broadcast %cst : f32 to vector<10x128xf32>
    %14 = arith.maximumf %12, %13 : vector<10x128xf32>
    %c0_3 = arith.constant 0 : index
    %c0_4 = arith.constant 0 : index
    %15 = vector.load %arg3[%c0_3, %c0_4] : memref<50x10xf32, #tpu.memory_space<vmem>>, vector<50x10xf32>
    %cst_5 = arith.constant dense<0.000000e+00> : vector<50x128xf32>
    %16 = tpu.matmul %15, %14, %cst_5 {dimension_numbers = #tpu.dot_dimension_numbers<[1], [0], [0], [1], [0, 0, 1, 1], [], []>} : vector<50x10xf32>, vector<10x128xf32>, vector<50x128xf32> -> vector<50x128xf32>
    %cst_6 = arith.constant 0.000000e+00 : f32
    %17 = vector.broadcast %cst_6 : f32 to vector<50x128xf32>
    %18 = arith.maximumf %16, %17 : vector<50x128xf32>
    %c0_7 = arith.constant 0 : index
    %c0_8 = arith.constant 0 : index
    %19 = vector.load %arg4[%c0_7, %c0_8] : memref<4x50xf32, #tpu.memory_space<vmem>>, vector<4x50xf32>
    %cst_9 = arith.constant dense<0.000000e+00> : vector<4x128xf32>
    %20 = tpu.matmul %19, %18, %cst_9 {dimension_numbers = #tpu.dot_dimension_numbers<[1], [0], [0], [1], [0, 0, 1, 1], [], []>} : vector<4x50xf32>, vector<50x128xf32>, vector<4x128xf32> -> vector<4x128xf32>
    %cst_10 = arith.constant dense<0xFF800000> : vector<128xf32>
    %21 = vector.multi_reduction <maximumf>, %20, %cst_10 [0] : vector<4x128xf32> to vector<128xf32>
    %22 = vector.shape_cast %21 : vector<128xf32> to vector<1x128xf32>
    %23 = vector.broadcast %22 : vector<1x128xf32> to vector<4x128xf32>
    %24 = arith.subf %20, %23 : vector<4x128xf32>
    %25 = math.exp %24 : vector<4x128xf32>
    %cst_11 = arith.constant dense<0.000000e+00> : vector<128xf32>
    %26 = vector.multi_reduction <add>, %25, %cst_11 [0] : vector<4x128xf32> to vector<128xf32>
    %27 = vector.shape_cast %26 : vector<128xf32> to vector<1x128xf32>
    %28 = tpu.reciprocal %27 : vector<1x128xf32> -> vector<1x128xf32>
    %29 = vector.broadcast %28 : vector<1x128xf32> to vector<4x128xf32>
    %30 = arith.mulf %25, %29 : vector<4x128xf32>
    %c0_12 = arith.constant 0 : index
    %c0_13 = arith.constant 0 : index
    %31 = vector.load %arg5[%c0_12, %c0_13] : memref<4x128xf32, #tpu.memory_space<vmem>>, vector<4x128xf32>
    tpu.vector_store %arg5[%c0_12, %c0_13], %30 {strides = array<i32>} : memref<4x128xf32, #tpu.memory_space<vmem>>, vector<4x128xf32>,
    return
  }
  func.func @transform_0(%arg0: i32) -> (i32, i32) {
    %c0_i32 = arith.constant 0 : i32
    %c0_i32_0 = arith.constant 0 : i32
    return %c0_i32, %arg0 : i32, i32
  }
  func.func @transform_1(%arg0: i32) -> (i32, i32) {
    %c0_i32 = arith.constant 0 : i32
    %c0_i32_0 = arith.constant 0 : i32
    %c0_i32_1 = arith.constant 0 : i32
    return %c0_i32, %c0_i32_0 : i32, i32
  }
  func.func @transform_2(%arg0: i32) -> (i32, i32) {
    %c0_i32 = arith.constant 0 : i32
    %c0_i32_0 = arith.constant 0 : i32
    %c0_i32_1 = arith.constant 0 : i32
    return %c0_i32, %c0_i32_0 : i32, i32
  }
  func.func @transform_3(%arg0: i32) -> (i32, i32) {
    %c0_i32 = arith.constant 0 : i32
    %c0_i32_0 = arith.constant 0 : i32
    %c0_i32_1 = arith.constant 0 : i32
    return %c0_i32, %c0_i32_0 : i32, i32
  }
  func.func @transform_4(%arg0: i32) -> (i32, i32) {
    %c0_i32 = arith.constant 0 : i32
    %c0_i32_0 = arith.constant 0 : i32
    return %c0_i32, %arg0 : i32, i32
  }
}

</mosaic_0001>

<llo_original>
// kernel: tpu_custom_call.1
$region0: #{tpu_custom_call.1}
  #allocation0 [shape = 'u32[]', space=smem, size = 0x4, offset = 0x4, fixed_abs, tag = 'smem constant byte address 0x4 - core index']
  #allocation1 [shape = 'u32[72,128]{1,0:T(1,128)}', space=vmem, size = 0x9000, scoped, tag = 'internal scratch']
  %s0 = inlined_call_operand.vmem [shape: f32[2,8], index: 0, kind: input, shape index: {}]
  %s1 = inlined_call_operand.vmem [shape: f32[10,2], index: 1, kind: input, shape index: {}]
  %s2 = inlined_call_operand.vmem [shape: f32[50,10], index: 2, kind: input, shape index: {}]
  %s3 = inlined_call_operand.vmem [shape: f32[4,50], index: 3, kind: input, shape index: {}]
  %s4 = inlined_call_operand.hbm [shape: f32[4,128], index: 4, kind: output, shape index: {}]
  %s5 = sld [smem:[#allocation0]]
  $region26: #{tpu_custom_call.1} parent=0
    _
  %s7 = ssub.s32 1, %s5
  %s8 = scalar_select 0, %s7, %s5
  $region1: #{tpu_custom_call.1} parent=0
    #allocation2 [shape = 'u8[2048]{0}', space=vmem, size = 0x800, scoped, tag = 'output window, operand 0, single buffered']
    #allocation3 [shape = 's32[1]{0}', space=sflag, size = 0x4, scoped, tag = 'scoped memory for tpu_custom_call.1']
    %9 = vsyncpa [#allocation3], 0
    // Predicated region
    $region2: #{tpu_custom_call.1} parent=1 // pred_check
      _
    $region3: #{tpu_custom_call.1} parent=1 // pred_check_branch
      %11 = sbr.rel (0) target = $region5
    $region4: #{tpu_custom_call.1} parent=1 // pred_region
      _
    $region5: #{tpu_custom_call.1} parent=1 // pred_fallthru
      _
    // Predicated region
    $region6: #{tpu_custom_call.1} parent=1 // pred_check
      _
    $region7: #{tpu_custom_call.1} parent=1 // pred_check_branch
      %13 = sbr.rel (0) target = $region9
    $region8: #{tpu_custom_call.1} parent=1 // pred_region
      _
    $region9: #{tpu_custom_call.1} parent=1 // pred_fallthru
      _
    // Predicated region
    $region10: #{tpu_custom_call.1} parent=1 // pred_check
      _
    $region11: #{tpu_custom_call.1} parent=1 // pred_check_branch
      %15 = sbr.rel (0) target = $region13
    $region12: #{tpu_custom_call.1} parent=1 // pred_region
      _
    $region13: #{tpu_custom_call.1} parent=1 // pred_fallthru
      _
    // Predicated region
    $region14: #{tpu_custom_call.1} parent=1 // pred_check
      _
    $region15: #{tpu_custom_call.1} parent=1 // pred_check_branch
      %17 = sbr.rel (0) target = $region17
    $region16: #{tpu_custom_call.1} parent=1 // pred_region
      _
    $region17: #{tpu_custom_call.1} parent=1 // pred_fallthru
      _
    %v18 = vld [vmem:[%s0] sm:$0x3]
    %v19 = vld [vmem:[%s1] sm:$0xff]
    %v20 = vld [vmem:[%s1 + $0x8] sm:$0x3]
    %22 = vset.pattern.permute.xlu0 0
    %23 = vperm.xlu0 %22, %v19
    %v24 = vpop.permute.xlu0 %23
    %27 = vset.pattern.permute.xlu0 0
    %28 = vperm.xlu0 %27, %v20
    %v29 = vpop.permute.xlu0 %28
    %v31 = vperm.slane %v18, 0
    %v32 = vmul.f32 %v24, %v31
    %v33 = vmul.f32 %v29, %v31
    %34 = vset.pattern.permute.xlu0 1
    %35 = vperm.xlu0 %34, %v19
    %v36 = vpop.permute.xlu0 %35
    %38 = vset.pattern.permute.xlu0 1
    %39 = vperm.xlu0 %38, %v20
    %v40 = vpop.permute.xlu0 %39
    %v42 = vperm.slane %v18, 1
    %v43 = vmul.f32 %v36, %v42
    %v44 = vmul.f32 %v40, %v42
    %v45 = vadd.f32 %v32, %v43
    %v46 = vadd.f32 %v33, %v44
    %v47 = vmax.f32 %v45, 0.0
    %v48 = vmax.f32 %v46, 0.0
    %v49 = vld [vmem:[%s2] sm:$0xff]
    %v50 = vld [vmem:[%s2 + $0x8] sm:$0xff]
    %v51 = vld [vmem:[%s2 + $0x10] sm:$0xff]
    %v52 = vld [vmem:[%s2 + $0x18] sm:$0xff]
    %v53 = vld [vmem:[%s2 + $0x20] sm:$0xff]
    %v54 = vld [vmem:[%s2 + $0x28] sm:$0xff]
    %v55 = vld [vmem:[%s2 + $0x30] sm:$0x3]
    %vm56 = vcmask 80896
    %v58 = vsel %vm56, %v49, 0
    %v61 = vsel %vm56, %v50, 0
    %v64 = vsel %vm56, %v51, 0
    %v67 = vsel %vm56, %v52, 0
    %v70 = vsel %vm56, %v53, 0
    %v73 = vsel %vm56, %v54, 0
    %v76 = vsel %vm56, %v55, 0
    %vm78 = vcmask 1041408
    %v80 = vsel %vm78, %v48, 0
    %82 = vmatpush.msra.mxu0 0.0
    %83 = vmatpush.msra.mxu0 0.0
    %84 = vmatpush.msra.mxu0 0.0
    %85 = vmatpush.msra.mxu0 0.0
    %86 = vmatpush.msra.mxu0 0.0
    %87 = vmatpush.msra.mxu0 0.0
    %88 = vmatpush.msra.mxu0 0.0
    %89 = vmatpush.msra.mxu0 0.0
    %90 = vmatpush.msra.mxu0 0.0
    %91 = vmatpush.msra.mxu0 0.0
    %92 = vmatpush.msra.mxu0 0.0
    %93 = vmatpush.msra.mxu0 0.0
    %94 = vmatpush.msra.mxu0 0.0
    %95 = vmatpush.msra.mxu0 0.0
    %96 = vmatpush.msra.mxu0 %v80
    %97 = vmatpush.msra.mxu0 %v47
    %98 = vmatmul.f32.gmra.mxu0 %v58
    %v99 = vpop.f32.mrf.mxu0
    %v100 = vadd.f32 0.0, %v99
    %101 = vmatmul.f32.gmra.mxu0 %v61
    %v102 = vpop.f32.mrf.mxu0
    %v103 = vadd.f32 0.0, %v102
    %104 = vmatmul.f32.gmra.mxu0 %v64
    %v105 = vpop.f32.mrf.mxu0
    %v106 = vadd.f32 0.0, %v105
    %107 = vmatmul.f32.gmra.mxu0 %v67
    %v108 = vpop.f32.mrf.mxu0
    %v109 = vadd.f32 0.0, %v108
    %110 = vmatmul.f32.gmra.mxu0 %v70
    %v111 = vpop.f32.mrf.mxu0
    %v112 = vadd.f32 0.0, %v111
    %113 = vmatmul.f32.gmra.mxu0 %v73
    %v114 = vpop.f32.mrf.mxu0
    %v115 = vadd.f32 0.0, %v114
    %116 = vmatmul.f32.gmra.mxu0 %v76
    %v117 = vpop.f32.mrf.mxu0
    %v118 = vadd.f32 0.0, %v117
    %119 = vdwg.mxu0
    %v120 = vmax.f32 %v100, 0.0
    %v121 = vmax.f32 %v103, 0.0
    %v122 = vmax.f32 %v106, 0.0
    %v123 = vmax.f32 %v109, 0.0
    %v124 = vmax.f32 %v112, 0.0
    %v125 = vmax.f32 %v115, 0.0
    %v126 = vmax.f32 %v118, 0.0
    %v127 = vld [vmem:[%s3] sm:$0xf]
    %vm128 = vcmask 408576
    %v130 = vsel %vm128, %v127, 0
    %v133 = vsel %vm78, %v126, 0
    %135 = vmatpush.msra.mxu0 0.0
    %136 = vmatpush.msra.mxu0 0.0
    %137 = vmatpush.msra.mxu0 0.0
    %138 = vmatpush.msra.mxu0 0.0
    %139 = vmatpush.msra.mxu0 0.0
    %140 = vmatpush.msra.mxu0 0.0
    %141 = vmatpush.msra.mxu0 0.0
    %142 = vmatpush.msra.mxu0 0.0
    %143 = vmatpush.msra.mxu0 0.0
    %144 = vmatpush.msra.mxu0 %v133
    %145 = vmatpush.msra.mxu0 %v125
    %146 = vmatpush.msra.mxu0 %v124
    %147 = vmatpush.msra.mxu0 %v123
    %148 = vmatpush.msra.mxu0 %v122
    %149 = vmatpush.msra.mxu0 %v121
    %150 = vmatpush.msra.mxu0 %v120
    %151 = vmatmul.f32.gmra.mxu0 %v130
    %v152 = vpop.f32.mrf.mxu0
    %v153 = vadd.f32 0.0, %v152
    %154 = vdwg.mxu0
    %vm155 = vcmask 1043456
    %v156 = vsel %vm155, %v153, -inf
    %v157 = vrot.slane %v156, 4
    %v158 = vmax.f32 %v156, %v157
    %v159 = vrot.slane %v158, 2
    %v160 = vmax.f32 %v158, %v159
    %v161 = vrot.slane %v160, 1
    %v162 = vmax.f32 %v160, %v161
    %v163 = vsub.f32 %v153, %v162
    %v164 = vmul.f32 %v163, 1.442695
    %v165 = vpow.pop %v164
    %v166 = vsel %vm155, %v165, 0.0
    %v167 = vrot.slane %v166, 4
    %v168 = vadd.f32 %v166, %v167
    %v169 = vrot.slane %v168, 2
    %v170 = vadd.f32 %v168, %v169
    %v171 = vrot.slane %v170, 1
    %v172 = vadd.f32 %v170, %v171
    %v173 = vrcp.pop %v172
    %v174 = vmul.f32 %v172, %v173
    %v175 = vsub.f32 1.0, %v174
    %v176 = vmul.f32 %v173, %v175
    %v177 = vadd.f32 %v173, %v176
    %vm178 = vweird.f32 %v172
    %vm179 = vweird.f32 %v173
    %vm180 = vmor %vm178, %vm179
    %v181 = vsel %vm180, %v173, %v177
    %v182 = vand.u32 2147483647, %v172
    %vm183 = vcmp.eq.f32.partialorder %v182, 8.507059e+37
    %v184 = vand.u32 %v172, 2147483648
    %v185 = vor.u32 1.1754944e-38, %v184
    %v186 = vsel %vm183, %v185, %v181
    %v187 = vmul.f32 %v165, %v186
    %188 = vst [vmem:[#allocation2] sm:$0xf] %v187
    // Predicated region
    $region18: #{tpu_custom_call.1} parent=1 // pred_check
      _
    $region19: #{tpu_custom_call.1} parent=1 // pred_check_branch
      %190 = sbr.rel (0) target = $region21
    $region20: #{tpu_custom_call.1} parent=1 // pred_region
      %192 = vsyncadd [#allocation3], 0
      %s194 = sshll.u32 [#allocation2], 4
      %s195 = int_to_ptr.vmem [resolvable:$true] %s194
      %s196 = sshll.u32 %s4, 4
      %s197 = int_to_ptr.hbm [resolvable:$true] %s196
      %199 = dma.vmem_to_hbm [thread:$0]  %s195, 64, %s197, [#allocation3]
    $region21: #{tpu_custom_call.1} parent=1 // pred_fallthru
      _
    // Predicated region
    $region22: #{tpu_custom_call.1} parent=1 // pred_check
      _
    $region23: #{tpu_custom_call.1} parent=1 // pred_check_branch
      %201 = sbr.rel (0) target = $region25
    $region24: #{tpu_custom_call.1} parent=1 // pred_region
      %203 = dma.done [#allocation3], 64
    $region25: #{tpu_custom_call.1} parent=1 // pred_fallthru
      _
    %204 = vsyncpa [#allocation3], 1

</llo_original>
